<compile_context>
chip_gen: v7x
topology: tpu7x:2x2x1
jax: 0.10.0
libtpu: 0.0.40
codegen_flags: <defaults>
</compile_context>

<pallas_src>
import functools

import jax
import jax.numpy as jnp
from jax.experimental import pallas as pl
from jax.experimental.pallas import tpu as pltpu

_BN_EPS = 1e-5


# ------------------------- Pallas kernel bodies -------------------------

def _layer_outputs(a_ref, x_ref, w_ref, gb_ref, num_layers, c_pad, c_out):
    """Run the GCNConv+BatchNorm stack; return the list of per-layer normalized
    outputs (f32 values held in registers/VMEM, never stored to HBM here)."""
    a = a_ref[...]                        # [N, N]      bf16, loaded once, reused
    x = x_ref[...]                        # [N, c_pad]  bf16 (input zero-padded)
    w_all = w_ref[...]                    # [L, c_pad, c_out] bf16, hoisted load
    gb = gb_ref[...]                      # [2L, c_out] f32, hoisted load

    outs = []
    for l in range(num_layers):           # static unrolled loop (L = 3)
        # Layer 0 consumes the c_pad-wide (zero-padded) input; later layers
        # consume the c_out-wide activation, so slice the zero-padded W rows
        # away statically instead of re-padding x every iteration.
        w = w_all[l] if l == 0 else w_all[l, :c_out, :]
        gamma = gb[2 * l:2 * l + 1, :]
        beta = gb[2 * l + 1:2 * l + 2, :]

        # GCNConv: H = X @ W ; Y = A_norm @ H     (bf16 MXU, f32 accumulate)
        # (GCNConv bias omitted: exactly cancelled by BN mean subtraction.)
        h = jnp.dot(x, w, preferred_element_type=jnp.float32)
        y = jnp.dot(a, h.astype(jnp.bfloat16),
                    preferred_element_type=jnp.float32)

        # BatchNorm1d, training-mode statistics over the node axis (f32 VPU).
        mean = jnp.mean(y, axis=0, keepdims=True)
        var = jnp.mean((y - mean) ** 2, axis=0, keepdims=True)
        yn = (y - mean) * jax.lax.rsqrt(var + _BN_EPS) * gamma + beta

        outs.append(yn)
        x = yn.astype(jnp.bfloat16)
    return outs


def _fused_gnn_pool_kernel(a_ref, x_ref, w_ref, gb_ref, pool_ref, out_ref,
                           *, num_layers, c_pad, c_out):
    outs = _layer_outputs(a_ref, x_ref, w_ref, gb_ref, num_layers, c_pad, c_out)
    pool = pool_ref[...]                  # [G, N] bf16, rows pre-scaled by 1/count
    pooled = [jnp.dot(pool, yn.astype(jnp.bfloat16),
                      preferred_element_type=jnp.float32) for yn in outs]
    # Single lane-dense [G, L*c_out] store (no per-layer masked column writes).
    out_ref[...] = jnp.concatenate(pooled, axis=-1)


def _fused_gnn_concat_kernel(a_ref, x_ref, w_ref, gb_ref, out_ref,
                             *, num_layers, c_pad, c_out):
    outs = _layer_outputs(a_ref, x_ref, w_ref, gb_ref, num_layers, c_pad, c_out)
    # Single 48-lane store instead of three 16-lane column-slice stores.
    out_ref[...] = jnp.concatenate(outs, axis=-1)


# ------------------------- plain-JAX glue -------------------------

def build_norm_adjacency(edge_index, num_nodes):
    """Dense D^-1/2 (A + I) D^-1/2 from a PyG-style edge_index [2, E].

    Duplicate edges are scatter-ADDED (matching PyG's gcn_norm on a
    non-coalesced edge_index) and self loops are added only for nodes lacking
    one (add_remaining_self_loops)."""
    src, dst = edge_index[0], edge_index[1]
    a = jnp.zeros((num_nodes, num_nodes), jnp.float32).at[dst, src].add(1.0)
    diag = jnp.diagonal(a)
    a_hat = a + jnp.diag(jnp.where(diag == 0.0, 1.0, 0.0))
    deg = jnp.sum(a_hat, axis=1)                  # in-degree incl. self loop
    d_inv_sqrt = jnp.where(deg > 0, jax.lax.rsqrt(deg), 0.0)
    return d_inv_sqrt[:, None] * a_hat * d_inv_sqrt[None, :]


def build_pool_matrix(batch, num_graphs, num_nodes):
    """[G, N] one-hot assignment with rows pre-scaled by 1/count -> mean pool."""
    m = (batch[None, :] == jnp.arange(num_graphs)[:, None]).astype(jnp.float32)
    counts = jnp.sum(m, axis=1, keepdims=True)
    return m * jnp.where(counts > 0, 1.0 / counts, 0.0)


@functools.partial(jax.jit, static_argnames=("num_graphs", "with_readout"))
def gnn_layer_forward(x, edge_index, batch, w_packed, gb_packed, num_graphs,
                      with_readout=True):
    """readout_op='concat', readout_type='mean'. Setup + one fused pallas_call,
    all under a single jit (adjacency build fuses with the casts/pads)."""
    n, c_in = x.shape
    num_layers, c_pad, c_out = w_packed.shape
    total = num_layers * c_out

    a_norm = build_norm_adjacency(edge_index, n).astype(jnp.bfloat16)
    x_pad = (jnp.zeros((n, c_pad), jnp.float32)
             .at[:, :c_in].set(x.astype(jnp.float32))
             .astype(jnp.bfloat16))

    vmem = pl.BlockSpec(memory_space=pltpu.MemorySpace.VMEM)

    if with_readout:
        pool_scaled = build_pool_matrix(batch, num_graphs, n).astype(jnp.bfloat16)
        kernel = functools.partial(_fused_gnn_pool_kernel,
                                   num_layers=num_layers, c_pad=c_pad, c_out=c_out)
        return pl.pallas_call(
            kernel,
            out_shape=jax.ShapeDtypeStruct((num_graphs, total), jnp.float32),
            in_specs=[vmem] * 5,
            out_specs=vmem,
        )(a_norm, x_pad, w_packed, gb_packed, pool_scaled)

    kernel = functools.partial(_fused_gnn_concat_kernel,
                               num_layers=num_layers, c_pad=c_pad, c_out=c_out)
    return pl.pallas_call(
        kernel,
        out_shape=jax.ShapeDtypeStruct((n, total), jnp.float32),
        in_specs=[vmem] * 4,
        out_specs=vmem,
    )(a_norm, x_pad, w_packed, gb_packed)


def init_packed_params(key, in_channels, hidden_channels, num_layers, out_channels):
    """Pack per-layer (W, gamma, beta) into two arrays:
       W  -> [L, c_pad, c_out] bf16 (zero-padded input rows for layer 0)
       gb -> [2L, c_out]       f32  (rows: gamma_0, beta_0, gamma_1, beta_1, ...)
    The GCNConv bias is intentionally not packed: it is exactly cancelled by the
    BatchNorm mean subtraction in forward(), so dropping it changes nothing."""
    dims = [in_channels] + [hidden_channels] * (num_layers - 1) + [out_channels]
    outs = dims[1:]
    assert len(set(outs)) == 1, "packed kernel assumes uniform per-layer width"
    c_out = outs[0]
    c_pad = max(max(dims[:-1]), c_out)

    w_packed = jnp.zeros((num_layers, c_pad, c_out), jnp.float32)
    gb_packed = jnp.zeros((2 * num_layers, c_out), jnp.float32)
    for i in range(num_layers):
        c_i = dims[i]
        key, kw, kg, kbe = jax.random.split(key, 4)
        w = jax.random.normal(kw, (c_i, c_out), jnp.float32) * jnp.sqrt(
            2.0 / (c_i + c_out))                                   # glorot-ish
        gamma = 1.0 + 0.1 * jax.random.normal(kg, (c_out,), jnp.float32)
        beta = 0.1 * jax.random.normal(kbe, (c_out,), jnp.float32)
        w_packed = w_packed.at[i, :c_i, :].set(w)
        gb_packed = gb_packed.at[2 * i, :].set(gamma)
        gb_packed = gb_packed.at[2 * i + 1, :].set(beta)
    return w_packed.astype(jnp.bfloat16), gb_packed


# ------------------------- driver -------------------------

if __name__ == "__main__":
    IN_C, HID_C, OUT_C, NUM_LAYERS = 8, 16, 16, 3
    N_NODES, N_GRAPHS = 32, 2

    key = jax.random.PRNGKey(0)
    k_x, k_e0, k_e1, k_p = jax.random.split(key, 4)

    # Node features.
    x = jax.random.normal(k_x, (N_NODES, IN_C), jnp.float32)

    # Two graphs of 16 nodes each; random undirected intra-graph edges.
    e0 = jax.random.randint(k_e0, (2, 24), 0, 16)
    e1 = jax.random.randint(k_e1, (2, 24), 16, 32)
    edge_index = jnp.concatenate([e0, e1], axis=1)
    edge_index = jnp.concatenate([edge_index, edge_index[::-1]], axis=1)  # symmetrize

    # Graph assignment vector.
    batch = jnp.concatenate(
        [jnp.zeros((16,), jnp.int32), jnp.ones((16,), jnp.int32)]
    )

    w_packed, gb_packed = init_packed_params(k_p, IN_C, HID_C, NUM_LAYERS, OUT_C)

    out = gnn_layer_forward(x, edge_index, batch, w_packed, gb_packed,
                            N_GRAPHS, with_readout=True)
    out = jax.block_until_ready(out)

    assert out.shape == (N_GRAPHS, 2 * HID_C + OUT_C), out.shape
    assert bool(jnp.all(jnp.isfinite(out)))

    # Also exercise the concat-only (with_readout=False) path once.
    out_nodes = jax.block_until_ready(
        gnn_layer_forward(x, edge_index, batch, w_packed, gb_packed,
                          N_GRAPHS, with_readout=False))
    assert out_nodes.shape == (N_NODES, 2 * HID_C + OUT_C), out_nodes.shape
    assert bool(jnp.all(jnp.isfinite(out_nodes)))

    print("KERNEL_OK")
</pallas_src>

<mosaic_0001>
module attributes {stable_mosaic.version = 11 : i64} {
  func.func private @main(%arg0: i32) attributes {dimension_semantics = [#tpu.dimension_semantics<core_parallel>], iteration_bounds = array<i64: 2>, tpu.core_type = #tpu.core_type<sc_scalar_subcore>, window_params = []} {
    return
  }
}

module attributes {stable_mosaic.version = 11 : i64} {
  func.func private @main(%arg0: i32) attributes {dimension_semantics = [#tpu.dimension_semantics<core_parallel>], iteration_bounds = array<i64: 2>, tpu.core_type = #tpu.core_type<sc_scalar_subcore>, window_params = []} {
    return
  }
}

module attributes {stable_mosaic.version = 11 : i64} {
  func.func @_fused_gnn_pool_kernel(%arg0: memref<32x32xbf16, #tpu.memory_space<vmem>>, %arg1: memref<32x16xbf16, #tpu.memory_space<vmem>>, %arg2: memref<3x16x16xbf16, #tpu.memory_space<vmem>>, %arg3: memref<6x16xf32, #tpu.memory_space<vmem>>, %arg4: memref<2x32xbf16, #tpu.memory_space<vmem>>, %arg5: memref<2x48xf32, #tpu.memory_space<vmem>>) attributes {dimension_semantics = [], scalar_prefetch = 0 : i64, scratch_operands = 0 : i64, tpu.core_type = #tpu.core_type<tc>} {
    %c0 = arith.constant 0 : index
    %c0_0 = arith.constant 0 : index
    %0 = vector.load %arg0[%c0, %c0_0] : memref<32x32xbf16, #tpu.memory_space<vmem>>, vector<32x32xbf16>
    %c0_1 = arith.constant 0 : index
    %c0_2 = arith.constant 0 : index
    %1 = vector.load %arg1[%c0_1, %c0_2] : memref<32x16xbf16, #tpu.memory_space<vmem>>, vector<32x16xbf16>
    %c0_3 = arith.constant 0 : index
    %c0_4 = arith.constant 0 : index
    %c0_5 = arith.constant 0 : index
    %2 = vector.load %arg2[%c0_3, %c0_4, %c0_5] : memref<3x16x16xbf16, #tpu.memory_space<vmem>>, vector<3x16x16xbf16>
    %c0_6 = arith.constant 0 : index
    %c0_7 = arith.constant 0 : index
    %3 = vector.load %arg3[%c0_6, %c0_7] : memref<6x16xf32, #tpu.memory_space<vmem>>, vector<6x16xf32>
    %4 = vector.extract_strided_slice %2 {offsets = [0, 0, 0], sizes = [1, 16, 16], strides = [1, 1, 1]} : vector<3x16x16xbf16> to vector<1x16x16xbf16>
    %5 = vector.shape_cast %4 : vector<1x16x16xbf16> to vector<16x16xbf16>
    %6 = vector.extract_strided_slice %3 {offsets = [0, 0], sizes = [1, 16], strides = [1, 1]} : vector<6x16xf32> to vector<1x16xf32>
    %7 = vector.extract_strided_slice %3 {offsets = [1, 0], sizes = [1, 16], strides = [1, 1]} : vector<6x16xf32> to vector<1x16xf32>
    %cst = arith.constant dense<0.000000e+00> : vector<32x16xf32>
    %8 = tpu.matmul %1, %5, %cst {dimension_numbers = #tpu.dot_dimension_numbers<[1], [0], [0], [1], [0, 0, 1, 1], [], []>} : vector<32x16xbf16>, vector<16x16xbf16>, vector<32x16xf32> -> vector<32x16xf32>
    %9 = arith.truncf %8 : vector<32x16xf32> to vector<32x16xbf16>
    %cst_8 = arith.constant dense<0.000000e+00> : vector<32x16xf32>
    %10 = tpu.matmul %0, %9, %cst_8 {dimension_numbers = #tpu.dot_dimension_numbers<[1], [0], [0], [1], [0, 0, 1, 1], [], []>} : vector<32x32xbf16>, vector<32x16xbf16>, vector<32x16xf32> -> vector<32x16xf32>
    %cst_9 = arith.constant dense<0.000000e+00> : vector<16xf32>
    %11 = vector.multi_reduction <add>, %10, %cst_9 [0] : vector<32x16xf32> to vector<16xf32>
    %12 = vector.shape_cast %11 : vector<16xf32> to vector<1x16xf32>
    %cst_10 = arith.constant 3.200000e+01 : f32
    %13 = vector.broadcast %cst_10 : f32 to vector<1x16xf32>
    %14 = arith.divf %12, %13 : vector<1x16xf32>
    %15 = vector.broadcast %14 : vector<1x16xf32> to vector<32x16xf32>
    %16 = arith.subf %10, %15 : vector<32x16xf32>
    %17 = arith.mulf %16, %16 : vector<32x16xf32>
    %cst_11 = arith.constant dense<0.000000e+00> : vector<16xf32>
    %18 = vector.multi_reduction <add>, %17, %cst_11 [0] : vector<32x16xf32> to vector<16xf32>
    %19 = vector.shape_cast %18 : vector<16xf32> to vector<1x16xf32>
    %cst_12 = arith.constant 3.200000e+01 : f32
    %20 = vector.broadcast %cst_12 : f32 to vector<1x16xf32>
    %21 = arith.divf %19, %20 : vector<1x16xf32>
    %22 = vector.broadcast %14 : vector<1x16xf32> to vector<32x16xf32>
    %23 = arith.subf %10, %22 : vector<32x16xf32>
    %cst_13 = arith.constant 9.99999974E-6 : f32
    %24 = vector.broadcast %cst_13 : f32 to vector<1x16xf32>
    %25 = arith.addf %21, %24 : vector<1x16xf32>
    %26 = math.rsqrt %25 : vector<1x16xf32>
    %27 = vector.broadcast %26 : vector<1x16xf32> to vector<32x16xf32>
    %28 = arith.mulf %23, %27 : vector<32x16xf32>
    %29 = vector.broadcast %6 : vector<1x16xf32> to vector<32x16xf32>
    %30 = arith.mulf %28, %29 : vector<32x16xf32>
    %31 = vector.broadcast %7 : vector<1x16xf32> to vector<32x16xf32>
    %32 = arith.addf %30, %31 : vector<32x16xf32>
    %33 = arith.truncf %32 : vector<32x16xf32> to vector<32x16xbf16>
    %34 = vector.extract_strided_slice %2 {offsets = [1, 0, 0], sizes = [1, 16, 16], strides = [1, 1, 1]} : vector<3x16x16xbf16> to vector<1x16x16xbf16>
    %35 = vector.shape_cast %34 : vector<1x16x16xbf16> to vector<16x16xbf16>
    %36 = vector.extract_strided_slice %3 {offsets = [2, 0], sizes = [1, 16], strides = [1, 1]} : vector<6x16xf32> to vector<1x16xf32>
    %37 = vector.extract_strided_slice %3 {offsets = [3, 0], sizes = [1, 16], strides = [1, 1]} : vector<6x16xf32> to vector<1x16xf32>
    %cst_14 = arith.constant dense<0.000000e+00> : vector<32x16xf32>
    %38 = tpu.matmul %33, %35, %cst_14 {dimension_numbers = #tpu.dot_dimension_numbers<[1], [0], [0], [1], [0, 0, 1, 1], [], []>} : vector<32x16xbf16>, vector<16x16xbf16>, vector<32x16xf32> -> vector<32x16xf32>
    %39 = arith.truncf %38 : vector<32x16xf32> to vector<32x16xbf16>
    %cst_15 = arith.constant dense<0.000000e+00> : vector<32x16xf32>
    %40 = tpu.matmul %0, %39, %cst_15 {dimension_numbers = #tpu.dot_dimension_numbers<[1], [0], [0], [1], [0, 0, 1, 1], [], []>} : vector<32x32xbf16>, vector<32x16xbf16>, vector<32x16xf32> -> vector<32x16xf32>
    %cst_16 = arith.constant dense<0.000000e+00> : vector<16xf32>
    %41 = vector.multi_reduction <add>, %40, %cst_16 [0] : vector<32x16xf32> to vector<16xf32>
    %42 = vector.shape_cast %41 : vector<16xf32> to vector<1x16xf32>
    %cst_17 = arith.constant 3.200000e+01 : f32
    %43 = vector.broadcast %cst_17 : f32 to vector<1x16xf32>
    %44 = arith.divf %42, %43 : vector<1x16xf32>
    %45 = vector.broadcast %44 : vector<1x16xf32> to vector<32x16xf32>
    %46 = arith.subf %40, %45 : vector<32x16xf32>
    %47 = arith.mulf %46, %46 : vector<32x16xf32>
    %cst_18 = arith.constant dense<0.000000e+00> : vector<16xf32>
    %48 = vector.multi_reduction <add>, %47, %cst_18 [0] : vector<32x16xf32> to vector<16xf32>
    %49 = vector.shape_cast %48 : vector<16xf32> to vector<1x16xf32>
    %cst_19 = arith.constant 3.200000e+01 : f32
    %50 = vector.broadcast %cst_19 : f32 to vector<1x16xf32>
    %51 = arith.divf %49, %50 : vector<1x16xf32>
    %52 = vector.broadcast %44 : vector<1x16xf32> to vector<32x16xf32>
    %53 = arith.subf %40, %52 : vector<32x16xf32>
    %cst_20 = arith.constant 9.99999974E-6 : f32
    %54 = vector.broadcast %cst_20 : f32 to vector<1x16xf32>
    %55 = arith.addf %51, %54 : vector<1x16xf32>
    %56 = math.rsqrt %55 : vector<1x16xf32>
    %57 = vector.broadcast %56 : vector<1x16xf32> to vector<32x16xf32>
    %58 = arith.mulf %53, %57 : vector<32x16xf32>
    %59 = vector.broadcast %36 : vector<1x16xf32> to vector<32x16xf32>
    %60 = arith.mulf %58, %59 : vector<32x16xf32>
    %61 = vector.broadcast %37 : vector<1x16xf32> to vector<32x16xf32>
    %62 = arith.addf %60, %61 : vector<32x16xf32>
    %63 = arith.truncf %62 : vector<32x16xf32> to vector<32x16xbf16>
    %64 = vector.extract_strided_slice %2 {offsets = [2, 0, 0], sizes = [1, 16, 16], strides = [1, 1, 1]} : vector<3x16x16xbf16> to vector<1x16x16xbf16>
    %65 = vector.shape_cast %64 : vector<1x16x16xbf16> to vector<16x16xbf16>
    %66 = vector.extract_strided_slice %3 {offsets = [4, 0], sizes = [1, 16], strides = [1, 1]} : vector<6x16xf32> to vector<1x16xf32>
    %67 = vector.extract_strided_slice %3 {offsets = [5, 0], sizes = [1, 16], strides = [1, 1]} : vector<6x16xf32> to vector<1x16xf32>
    %cst_21 = arith.constant dense<0.000000e+00> : vector<32x16xf32>
    %68 = tpu.matmul %63, %65, %cst_21 {dimension_numbers = #tpu.dot_dimension_numbers<[1], [0], [0], [1], [0, 0, 1, 1], [], []>} : vector<32x16xbf16>, vector<16x16xbf16>, vector<32x16xf32> -> vector<32x16xf32>
    %69 = arith.truncf %68 : vector<32x16xf32> to vector<32x16xbf16>
    %cst_22 = arith.constant dense<0.000000e+00> : vector<32x16xf32>
    %70 = tpu.matmul %0, %69, %cst_22 {dimension_numbers = #tpu.dot_dimension_numbers<[1], [0], [0], [1], [0, 0, 1, 1], [], []>} : vector<32x32xbf16>, vector<32x16xbf16>, vector<32x16xf32> -> vector<32x16xf32>
    %cst_23 = arith.constant dense<0.000000e+00> : vector<16xf32>
    %71 = vector.multi_reduction <add>, %70, %cst_23 [0] : vector<32x16xf32> to vector<16xf32>
    %72 = vector.shape_cast %71 : vector<16xf32> to vector<1x16xf32>
    %cst_24 = arith.constant 3.200000e+01 : f32
    %73 = vector.broadcast %cst_24 : f32 to vector<1x16xf32>
    %74 = arith.divf %72, %73 : vector<1x16xf32>
    %75 = vector.broadcast %74 : vector<1x16xf32> to vector<32x16xf32>
    %76 = arith.subf %70, %75 : vector<32x16xf32>
    %77 = arith.mulf %76, %76 : vector<32x16xf32>
    %cst_25 = arith.constant dense<0.000000e+00> : vector<16xf32>
    %78 = vector.multi_reduction <add>, %77, %cst_25 [0] : vector<32x16xf32> to vector<16xf32>
    %79 = vector.shape_cast %78 : vector<16xf32> to vector<1x16xf32>
    %cst_26 = arith.constant 3.200000e+01 : f32
    %80 = vector.broadcast %cst_26 : f32 to vector<1x16xf32>
    %81 = arith.divf %79, %80 : vector<1x16xf32>
    %82 = vector.broadcast %74 : vector<1x16xf32> to vector<32x16xf32>
    %83 = arith.subf %70, %82 : vector<32x16xf32>
    %cst_27 = arith.constant 9.99999974E-6 : f32
    %84 = vector.broadcast %cst_27 : f32 to vector<1x16xf32>
    %85 = arith.addf %81, %84 : vector<1x16xf32>
    %86 = math.rsqrt %85 : vector<1x16xf32>
    %87 = vector.broadcast %86 : vector<1x16xf32> to vector<32x16xf32>
    %88 = arith.mulf %83, %87 : vector<32x16xf32>
    %89 = vector.broadcast %66 : vector<1x16xf32> to vector<32x16xf32>
    %90 = arith.mulf %88, %89 : vector<32x16xf32>
    %91 = vector.broadcast %67 : vector<1x16xf32> to vector<32x16xf32>
    %92 = arith.addf %90, %91 : vector<32x16xf32>
    %c0_28 = arith.constant 0 : index
    %c0_29 = arith.constant 0 : index
    %93 = vector.load %arg4[%c0_28, %c0_29] : memref<2x32xbf16, #tpu.memory_space<vmem>>, vector<2x32xbf16>
    %94 = arith.truncf %32 : vector<32x16xf32> to vector<32x16xbf16>
    %cst_30 = arith.constant dense<0.000000e+00> : vector<2x16xf32>
    %95 = tpu.matmul %93, %94, %cst_30 {dimension_numbers = #tpu.dot_dimension_numbers<[1], [0], [0], [1], [0, 0, 1, 1], [], []>} : vector<2x32xbf16>, vector<32x16xbf16>, vector<2x16xf32> -> vector<2x16xf32>
    %96 = arith.truncf %62 : vector<32x16xf32> to vector<32x16xbf16>
    %cst_31 = arith.constant dense<0.000000e+00> : vector<2x16xf32>
    %97 = tpu.matmul %93, %96, %cst_31 {dimension_numbers = #tpu.dot_dimension_numbers<[1], [0], [0], [1], [0, 0, 1, 1], [], []>} : vector<2x32xbf16>, vector<32x16xbf16>, vector<2x16xf32> -> vector<2x16xf32>
    %98 = arith.truncf %92 : vector<32x16xf32> to vector<32x16xbf16>
    %cst_32 = arith.constant dense<0.000000e+00> : vector<2x16xf32>
    %99 = tpu.matmul %93, %98, %cst_32 {dimension_numbers = #tpu.dot_dimension_numbers<[1], [0], [0], [1], [0, 0, 1, 1], [], []>} : vector<2x32xbf16>, vector<32x16xbf16>, vector<2x16xf32> -> vector<2x16xf32>
    %100 = tpu.concatenate %95, %97, %99 in 1 : vector<2x16xf32>, vector<2x16xf32>, vector<2x16xf32> -> vector<2x48xf32>
    %c0_33 = arith.constant 0 : index
    %c0_34 = arith.constant 0 : index
    %101 = vector.load %arg5[%c0_33, %c0_34] : memref<2x48xf32, #tpu.memory_space<vmem>>, vector<2x48xf32>
    tpu.vector_store %arg5[%c0_33, %c0_34], %100 {strides = array<i32>} : memref<2x48xf32, #tpu.memory_space<vmem>>, vector<2x48xf32>,
    return
  }
}

</mosaic_0001>

<llo_original>
// kernel: gnn_layer_forward.1
$region0: #{gnn_layer_forward.1}
  #allocation0 [shape = 'u32[]', space=smem, size = 0x4, offset = 0x4, fixed_abs, tag = 'smem constant byte address 0x4 - core index']
  #allocation1 [shape = 'u32[144,128]{1,0:T(1,128)}', space=vmem, size = 0x12000, scoped, tag = 'internal scratch']
  %s0 = inlined_call_operand.vmem [shape: bf16[32,32], index: 0, kind: input, shape index: {}]
  %s1 = inlined_call_operand.vmem [shape: bf16[32,16], index: 1, kind: input, shape index: {}]
  %s2 = inlined_call_operand.vmem [shape: bf16[3,16,16], index: 2, kind: input, shape index: {}]
  %s3 = inlined_call_operand.vmem [shape: f32[6,16], index: 3, kind: input, shape index: {}]
  %s4 = inlined_call_operand.vmem [shape: bf16[2,32], index: 4, kind: input, shape index: {}]
  %s5 = inlined_call_operand.hbm [shape: f32[2,48], index: 5, kind: output, shape index: {}]
  %s6 = sld [smem:[#allocation0]]
  $region30: #{gnn_layer_forward.1} parent=0
    _
  %s8 = ssub.s32 1, %s6
  %s9 = scalar_select 0, %s8, %s6
  $region1: #{gnn_layer_forward.1} parent=0
    #allocation2 [shape = 'u8[1024]{0}', space=vmem, size = 0x400, scoped, tag = 'output window, operand 0, single buffered']
    #allocation3 [shape = 's32[1]{0}', space=sflag, size = 0x4, scoped, tag = 'scoped memory for gnn_layer_forward.1']
    %10 = vsyncpa [#allocation3], 0
    // Predicated region
    $region2: #{gnn_layer_forward.1} parent=1 // pred_check
      _
    $region3: #{gnn_layer_forward.1} parent=1 // pred_check_branch
      %12 = sbr.rel (0) target = $region5
    $region4: #{gnn_layer_forward.1} parent=1 // pred_region
      _
    $region5: #{gnn_layer_forward.1} parent=1 // pred_fallthru
      _
    // Predicated region
    $region6: #{gnn_layer_forward.1} parent=1 // pred_check
      _
    $region7: #{gnn_layer_forward.1} parent=1 // pred_check_branch
      %14 = sbr.rel (0) target = $region9
    $region8: #{gnn_layer_forward.1} parent=1 // pred_region
      _
    $region9: #{gnn_layer_forward.1} parent=1 // pred_fallthru
      _
    // Predicated region
    $region10: #{gnn_layer_forward.1} parent=1 // pred_check
      _
    $region11: #{gnn_layer_forward.1} parent=1 // pred_check_branch
      %16 = sbr.rel (0) target = $region13
    $region12: #{gnn_layer_forward.1} parent=1 // pred_region
      _
    $region13: #{gnn_layer_forward.1} parent=1 // pred_fallthru
      _
    // Predicated region
    $region14: #{gnn_layer_forward.1} parent=1 // pred_check
      _
    $region15: #{gnn_layer_forward.1} parent=1 // pred_check_branch
      %18 = sbr.rel (0) target = $region17
    $region16: #{gnn_layer_forward.1} parent=1 // pred_region
      _
    $region17: #{gnn_layer_forward.1} parent=1 // pred_fallthru
      _
    // Predicated region
    $region18: #{gnn_layer_forward.1} parent=1 // pred_check
      _
    $region19: #{gnn_layer_forward.1} parent=1 // pred_check_branch
      %20 = sbr.rel (0) target = $region21
    $region20: #{gnn_layer_forward.1} parent=1 // pred_region
      _
    $region21: #{gnn_layer_forward.1} parent=1 // pred_fallthru
      _
    %v22 = vld [vmem:[%s0] sm:$0xf]
    %v23 = vld [vmem:[%s0 + $0x4] sm:$0xf]
    %v24 = vld [vmem:[%s0 + $0x8] sm:$0xf]
    %v25 = vld [vmem:[%s0 + $0xc] sm:$0xf]
    %v26 = vld [vmem:[%s1] sm:$0xf]
    %v27 = vld [vmem:[%s1 + $0x4] sm:$0xf]
    %v28 = vld [vmem:[%s1 + $0x8] sm:$0xf]
    %v29 = vld [vmem:[%s1 + $0xc] sm:$0xf]
    %v30 = vld [vmem:[%s2] sm:$0xf]
    %v31 = vld [vmem:[%s2 + $0x4] sm:$0xf]
    %v32 = vld [vmem:[%s2 + $0x8] sm:$0xf]
    %v33 = vld [vmem:[%s2 + $0xc] sm:$0xf]
    %v34 = vld [vmem:[%s2 + $0x10] sm:$0xf]
    %v35 = vld [vmem:[%s2 + $0x14] sm:$0xf]
    %v36 = vld [vmem:[%s3] sm:$0x3f]
    %v41 = vunpack.c.l.b16 %v26
    %v42 = vunpack.c.l.b16 %v27
    %v43 = vunpack.c.l.b16 %v28
    %v44 = vunpack.c.l.b16 %v29
    %v45 = vpack.c.b16 %v42, %v41
    %v46 = vpack.c.b16 %v44, %v43
    %v49 = vunpack.c.l.b16 %v30
    %v50 = vunpack.c.l.b16 %v31
    %v51 = vpack.c.b16 %v50, %v49
    %vm53 = vcmask 130048
    %v55 = vsel %vm53, %v45, 0
    %v58 = vsel %vm53, %v46, 0
    %60 = vmatprep.subr.bf16.mxu0 0
    %61 = vmatpush1.bf16.msra.mxu0 %v51
    %62 = vmatprep.subr.bf16.mxu0 0
    %63 = vmatpush1.bf16.msra.mxu0 0
    %64 = vmatprep.subr.bf16.mxu0 0
    %65 = vmatpush1.bf16.msra.mxu0 0
    %66 = vmatprep.subr.bf16.mxu0 0
    %67 = vmatpush1.bf16.msra.mxu0 0
    %68 = vmatprep.subr.bf16.mxu0 0
    %69 = vmatpush1.bf16.msra.mxu0 0
    %70 = vmatprep.subr.bf16.mxu0 0
    %71 = vmatpush1.bf16.msra.mxu0 0
    %72 = vmatprep.subr.bf16.mxu0 0
    %73 = vmatpush1.bf16.msra.mxu0 0
    %74 = vmatprep.subr.bf16.mxu0 0
    %75 = vmatpush1.bf16.msra.mxu0 0
    %76 = vmatprep.subr.bf16.mxu0 0
    %77 = vmatpush1.bf16.msra.mxu0 0
    %78 = vmatprep.subr.bf16.mxu0 0
    %79 = vmatpush1.bf16.msra.mxu0 0
    %80 = vmatprep.subr.bf16.mxu0 0
    %81 = vmatpush1.bf16.msra.mxu0 0
    %82 = vmatprep.subr.bf16.mxu0 0
    %83 = vmatpush1.bf16.msra.mxu0 0
    %84 = vmatprep.subr.bf16.mxu0 0
    %85 = vmatpush1.bf16.msra.mxu0 0
    %86 = vmatprep.subr.bf16.mxu0 0
    %87 = vmatpush1.bf16.msra.mxu0 0
    %88 = vmatprep.subr.bf16.mxu0 0
    %89 = vmatpush1.bf16.msra.mxu0 0
    %90 = vmatprep.subr.bf16.mxu0 0
    %91 = vmatpush1.bf16.msra.mxu0 0
    %92 = vmatprep.mubr.bf16.mxu0 0
    %93 = vmatmul.mubr.bf16.gmra.mrb[0].mxu0 %v55
    %v94 = vpop.f32.mrb[0].mxu0
    %v95 = vadd.f32 0.0, %v94
    %v96 = vpop.f32.mrb[0].mxu0
    %v97 = vpop.f32.mrb[0].mxu0
    %v98 = vadd.f32 0.0, %v97
    %v99 = vpop.f32.mrb[0].mxu0
    %100 = vmatprep.mubr.bf16.mxu0 0
    %101 = vmatmul.mubr.bf16.gmra.mrb[0].mxu0 %v58
    %v102 = vpop.f32.mrb[0].mxu0
    %v103 = vadd.f32 0.0, %v102
    %v104 = vpop.f32.mrb[0].mxu0
    %v105 = vpop.f32.mrb[0].mxu0
    %v106 = vadd.f32 0.0, %v105
    %v107 = vpop.f32.mrb[0].mxu0
    %108 = vdwg.mxu0
    %v109 = vpack.c.bf16 %v98, %v95
    %v110 = vpack.c.bf16 %v106, %v103
    %v115 = vunpack.c.l.b16 %v22
    %v116 = vunpack.c.l.b16 %v23
    %v117 = vunpack.c.l.b16 %v24
    %v118 = vunpack.c.l.b16 %v25
    %v119 = vpack.c.b16 %v116, %v115
    %v120 = vpack.c.b16 %v118, %v117
    %vm121 = vcmask 261120
    %v123 = vsel %vm121, %v119, 0
    %v126 = vsel %vm121, %v120, 0
    %128 = vmatprep.subr.bf16.mxu0 0
    %129 = vmatpush1.bf16.msra.mxu0 %v109
    %130 = vmatprep.subr.bf16.mxu0 0
    %131 = vmatpush1.bf16.msra.mxu0 %v110
    %132 = vmatprep.subr.bf16.mxu0 0
    %133 = vmatpush1.bf16.msra.mxu0 0
    %134 = vmatprep.subr.bf16.mxu0 0
    %135 = vmatpush1.bf16.msra.mxu0 0
    %136 = vmatprep.subr.bf16.mxu0 0
    %137 = vmatpush1.bf16.msra.mxu0 0
    %138 = vmatprep.subr.bf16.mxu0 0
    %139 = vmatpush1.bf16.msra.mxu0 0
    %140 = vmatprep.subr.bf16.mxu0 0
    %141 = vmatpush1.bf16.msra.mxu0 0
    %142 = vmatprep.subr.bf16.mxu0 0
    %143 = vmatpush1.bf16.msra.mxu0 0
    %144 = vmatprep.subr.bf16.mxu0 0
    %145 = vmatpush1.bf16.msra.mxu0 0
    %146 = vmatprep.subr.bf16.mxu0 0
    %147 = vmatpush1.bf16.msra.mxu0 0
    %148 = vmatprep.subr.bf16.mxu0 0
    %149 = vmatpush1.bf16.msra.mxu0 0
    %150 = vmatprep.subr.bf16.mxu0 0
    %151 = vmatpush1.bf16.msra.mxu0 0
    %152 = vmatprep.subr.bf16.mxu0 0
    %153 = vmatpush1.bf16.msra.mxu0 0
    %154 = vmatprep.subr.bf16.mxu0 0
    %155 = vmatpush1.bf16.msra.mxu0 0
    %156 = vmatprep.subr.bf16.mxu0 0
    %157 = vmatpush1.bf16.msra.mxu0 0
    %158 = vmatprep.subr.bf16.mxu0 0
    %159 = vmatpush1.bf16.msra.mxu0 0
    %160 = vmatprep.mubr.bf16.mxu0 0
    %161 = vmatmul.mubr.bf16.gmra.mrb[0].mxu0 %v123
    %v162 = vpop.f32.mrb[0].mxu0
    %v163 = vadd.f32 0.0, %v162
    %v164 = vpop.f32.mrb[0].mxu0
    %v165 = vpop.f32.mrb[0].mxu0
    %v166 = vadd.f32 0.0, %v165
    %v167 = vpop.f32.mrb[0].mxu0
    %168 = vmatprep.mubr.bf16.mxu0 0
    %169 = vmatmul.mubr.bf16.gmra.mrb[0].mxu0 %v126
    %v170 = vpop.f32.mrb[0].mxu0
    %v171 = vadd.f32 0.0, %v170
    %v172 = vpop.f32.mrb[0].mxu0
    %v173 = vpop.f32.mrb[0].mxu0
    %v174 = vadd.f32 0.0, %v173
    %v175 = vpop.f32.mrb[0].mxu0
    %176 = vdwg.mxu0
    %v177 = vsel %vm53, %v163, 0.0
    %v178 = vsel %vm53, %v166, 0.0
    %v179 = vadd.f32 %v177, %v178
    %v180 = vsel %vm53, %v171, 0.0
    %v181 = vadd.f32 %v179, %v180
    %v182 = vsel %vm53, %v174, 0.0
    %v183 = vadd.f32 %v181, %v182
    %v184 = vrot.slane %v183, 4
    %v185 = vadd.f32 %v183, %v184
    %v186 = vrot.slane %v185, 2
    %v187 = vadd.f32 %v185, %v186
    %v188 = vrot.slane %v187, 1
    %v189 = vadd.f32 %v187, %v188
    %v190 = vrcp.pop 32.0
    %v191 = vmul.f32 %v189, %v190
    %v192 = vsub.f32 %v163, %v191
    %v193 = vsub.f32 %v166, %v191
    %v194 = vsub.f32 %v171, %v191
    %v195 = vsub.f32 %v174, %v191
    %v196 = vmul.f32 %v192, %v192
    %v197 = vmul.f32 %v193, %v193
    %v198 = vmul.f32 %v194, %v194
    %v199 = vmul.f32 %v195, %v195
    %v200 = vsel %vm53, %v196, 0.0
    %v201 = vsel %vm53, %v197, 0.0
    %v202 = vadd.f32 %v200, %v201
    %v203 = vsel %vm53, %v198, 0.0
    %v204 = vadd.f32 %v202, %v203
    %v205 = vsel %vm53, %v199, 0.0
    %v206 = vadd.f32 %v204, %v205
    %v207 = vrot.slane %v206, 4
    %v208 = vadd.f32 %v206, %v207
    %v209 = vrot.slane %v208, 2
    %v210 = vadd.f32 %v208, %v209
    %v211 = vrot.slane %v210, 1
    %v212 = vadd.f32 %v210, %v211
    %v213 = vmul.f32 %v212, %v190
    %v214 = vadd.f32 %v213, 1e-05
    %v215 = vrsqrt.pop %v214
    %v216 = vmul.f32 %v192, %v215
    %v217 = vmul.f32 %v193, %v215
    %v218 = vmul.f32 %v194, %v215
    %v219 = vmul.f32 %v195, %v215
    %v220 = vlaneseq
    %v221 = vshrl.u32 %v220, 7
    %v222 = vsub.s32 0, %v221
    %v223 = vrot.slane %v36, %v222
    %v224 = vmul.f32 %v216, %v223
    %v225 = vmul.f32 %v217, %v223
    %v226 = vmul.f32 %v218, %v223
    %v227 = vmul.f32 %v219, %v223
    %v228 = vlaneseq
    %v229 = vshrl.u32 %v228, 7
    %v230 = vsub.s32 1, %v229
    %v231 = vrot.slane %v36, %v230
    %v232 = vadd.f32 %v224, %v231
    %v233 = vadd.f32 %v225, %v231
    %v234 = vadd.f32 %v226, %v231
    %v235 = vadd.f32 %v227, %v231
    %v236 = vpack.c.bf16 %v233, %v232
    %v237 = vpack.c.bf16 %v235, %v234
    %v240 = vunpack.c.l.b16 %v32
    %v241 = vunpack.c.l.b16 %v33
    %v242 = vpack.c.b16 %v241, %v240
    %v245 = vsel %vm53, %v236, 0
    %v248 = vsel %vm53, %v237, 0
    %250 = vmatprep.subr.bf16.mxu0 0
    %251 = vmatpush1.bf16.msra.mxu0 %v242
    %252 = vmatprep.subr.bf16.mxu0 0
    %253 = vmatpush1.bf16.msra.mxu0 0
    %254 = vmatprep.subr.bf16.mxu0 0
    %255 = vmatpush1.bf16.msra.mxu0 0
    %256 = vmatprep.subr.bf16.mxu0 0
    %257 = vmatpush1.bf16.msra.mxu0 0
    %258 = vmatprep.subr.bf16.mxu0 0
    %259 = vmatpush1.bf16.msra.mxu0 0
    %260 = vmatprep.subr.bf16.mxu0 0
    %261 = vmatpush1.bf16.msra.mxu0 0
    %262 = vmatprep.subr.bf16.mxu0 0
    %263 = vmatpush1.bf16.msra.mxu0 0
    %264 = vmatprep.subr.bf16.mxu0 0
    %265 = vmatpush1.bf16.msra.mxu0 0
    %266 = vmatprep.subr.bf16.mxu0 0
    %267 = vmatpush1.bf16.msra.mxu0 0
    %268 = vmatprep.subr.bf16.mxu0 0
    %269 = vmatpush1.bf16.msra.mxu0 0
    %270 = vmatprep.subr.bf16.mxu0 0
    %271 = vmatpush1.bf16.msra.mxu0 0
    %272 = vmatprep.subr.bf16.mxu0 0
    %273 = vmatpush1.bf16.msra.mxu0 0
    %274 = vmatprep.subr.bf16.mxu0 0
    %275 = vmatpush1.bf16.msra.mxu0 0
    %276 = vmatprep.subr.bf16.mxu0 0
    %277 = vmatpush1.bf16.msra.mxu0 0
    %278 = vmatprep.subr.bf16.mxu0 0
    %279 = vmatpush1.bf16.msra.mxu0 0
    %280 = vmatprep.subr.bf16.mxu0 0
    %281 = vmatpush1.bf16.msra.mxu0 0
    %282 = vmatprep.mubr.bf16.mxu0 0
    %283 = vmatmul.mubr.bf16.gmra.mrb[0].mxu0 %v245
    %v284 = vpop.f32.mrb[0].mxu0
    %v285 = vadd.f32 0.0, %v284
    %v286 = vpop.f32.mrb[0].mxu0
    %v287 = vpop.f32.mrb[0].mxu0
    %v288 = vadd.f32 0.0, %v287
    %v289 = vpop.f32.mrb[0].mxu0
    %290 = vmatprep.mubr.bf16.mxu0 0
    %291 = vmatmul.mubr.bf16.gmra.mrb[0].mxu0 %v248
    %v292 = vpop.f32.mrb[0].mxu0
    %v293 = vadd.f32 0.0, %v292
    %v294 = vpop.f32.mrb[0].mxu0
    %v295 = vpop.f32.mrb[0].mxu0
    %v296 = vadd.f32 0.0, %v295
    %v297 = vpop.f32.mrb[0].mxu0
    %298 = vdwg.mxu0
    %v299 = vpack.c.bf16 %v288, %v285
    %v300 = vpack.c.bf16 %v296, %v293
    %301 = vmatprep.subr.bf16.mxu0 0
    %302 = vmatpush1.bf16.msra.mxu0 %v299
    %303 = vmatprep.subr.bf16.mxu0 0
    %304 = vmatpush1.bf16.msra.mxu0 %v300
    %305 = vmatprep.subr.bf16.mxu0 0
    %306 = vmatpush1.bf16.msra.mxu0 0
    %307 = vmatprep.subr.bf16.mxu0 0
    %308 = vmatpush1.bf16.msra.mxu0 0
    %309 = vmatprep.subr.bf16.mxu0 0
    %310 = vmatpush1.bf16.msra.mxu0 0
    %311 = vmatprep.subr.bf16.mxu0 0
    %312 = vmatpush1.bf16.msra.mxu0 0
    %313 = vmatprep.subr.bf16.mxu0 0
    %314 = vmatpush1.bf16.msra.mxu0 0
    %315 = vmatprep.subr.bf16.mxu0 0
    %316 = vmatpush1.bf16.msra.mxu0 0
    %317 = vmatprep.subr.bf16.mxu0 0
    %318 = vmatpush1.bf16.msra.mxu0 0
    %319 = vmatprep.subr.bf16.mxu0 0
    %320 = vmatpush1.bf16.msra.mxu0 0
    %321 = vmatprep.subr.bf16.mxu0 0
    %322 = vmatpush1.bf16.msra.mxu0 0
    %323 = vmatprep.subr.bf16.mxu0 0
    %324 = vmatpush1.bf16.msra.mxu0 0
    %325 = vmatprep.subr.bf16.mxu0 0
    %326 = vmatpush1.bf16.msra.mxu0 0
    %327 = vmatprep.subr.bf16.mxu0 0
    %328 = vmatpush1.bf16.msra.mxu0 0
    %329 = vmatprep.subr.bf16.mxu0 0
    %330 = vmatpush1.bf16.msra.mxu0 0
    %331 = vmatprep.subr.bf16.mxu0 0
    %332 = vmatpush1.bf16.msra.mxu0 0
    %333 = vmatprep.mubr.bf16.mxu0 0
    %334 = vmatmul.mubr.bf16.gmra.mrb[0].mxu0 %v123
    %v335 = vpop.f32.mrb[0].mxu0
    %v336 = vadd.f32 0.0, %v335
    %v337 = vpop.f32.mrb[0].mxu0
    %v338 = vpop.f32.mrb[0].mxu0
    %v339 = vadd.f32 0.0, %v338
    %v340 = vpop.f32.mrb[0].mxu0
    %341 = vmatprep.mubr.bf16.mxu0 0
    %342 = vmatmul.mubr.bf16.gmra.mrb[0].mxu0 %v126
    %v343 = vpop.f32.mrb[0].mxu0
    %v344 = vadd.f32 0.0, %v343
    %v345 = vpop.f32.mrb[0].mxu0
    %v346 = vpop.f32.mrb[0].mxu0
    %v347 = vadd.f32 0.0, %v346
    %v348 = vpop.f32.mrb[0].mxu0
    %349 = vdwg.mxu0
    %v350 = vsel %vm53, %v336, 0.0
    %v351 = vsel %vm53, %v339, 0.0
    %v352 = vadd.f32 %v350, %v351
    %v353 = vsel %vm53, %v344, 0.0
    %v354 = vadd.f32 %v352, %v353
    %v355 = vsel %vm53, %v347, 0.0
    %v356 = vadd.f32 %v354, %v355
    %v357 = vrot.slane %v356, 4
    %v358 = vadd.f32 %v356, %v357
    %v359 = vrot.slane %v358, 2
    %v360 = vadd.f32 %v358, %v359
    %v361 = vrot.slane %v360, 1
    %v362 = vadd.f32 %v360, %v361
    %v363 = vmul.f32 %v362, %v190
    %v364 = vsub.f32 %v336, %v363
    %v365 = vsub.f32 %v339, %v363
    %v366 = vsub.f32 %v344, %v363
    %v367 = vsub.f32 %v347, %v363
    %v368 = vmul.f32 %v364, %v364
    %v369 = vmul.f32 %v365, %v365
    %v370 = vmul.f32 %v366, %v366
    %v371 = vmul.f32 %v367, %v367
    %v372 = vsel %vm53, %v368, 0.0
    %v373 = vsel %vm53, %v369, 0.0
    %v374 = vadd.f32 %v372, %v373
    %v375 = vsel %vm53, %v370, 0.0
    %v376 = vadd.f32 %v374, %v375
    %v377 = vsel %vm53, %v371, 0.0
    %v378 = vadd.f32 %v376, %v377
    %v379 = vrot.slane %v378, 4
    %v380 = vadd.f32 %v378, %v379
    %v381 = vrot.slane %v380, 2
    %v382 = vadd.f32 %v380, %v381
    %v383 = vrot.slane %v382, 1
    %v384 = vadd.f32 %v382, %v383
    %v385 = vmul.f32 %v384, %v190
    %v386 = vadd.f32 %v385, 1e-05
    %v387 = vrsqrt.pop %v386
    %v388 = vmul.f32 %v364, %v387
    %v389 = vmul.f32 %v365, %v387
    %v390 = vmul.f32 %v366, %v387
    %v391 = vmul.f32 %v367, %v387
    %v392 = vlaneseq
    %v393 = vshrl.u32 %v392, 7
    %v394 = vsub.s32 2, %v393
    %v395 = vrot.slane %v36, %v394
    %v396 = vmul.f32 %v388, %v395
    %v397 = vmul.f32 %v389, %v395
    %v398 = vmul.f32 %v390, %v395
    %v399 = vmul.f32 %v391, %v395
    %v400 = vlaneseq
    %v401 = vshrl.u32 %v400, 7
    %v402 = vsub.s32 3, %v401
    %v403 = vrot.slane %v36, %v402
    %v404 = vadd.f32 %v396, %v403
    %v405 = vadd.f32 %v397, %v403
    %v406 = vadd.f32 %v398, %v403
    %v407 = vadd.f32 %v399, %v403
    %v408 = vpack.c.bf16 %v405, %v404
    %v409 = vpack.c.bf16 %v407, %v406
    %v412 = vunpack.c.l.b16 %v34
    %v413 = vunpack.c.l.b16 %v35
    %v414 = vpack.c.b16 %v413, %v412
    %v417 = vsel %vm53, %v408, 0
    %v420 = vsel %vm53, %v409, 0
    %422 = vmatprep.subr.bf16.mxu0 0
    %423 = vmatpush1.bf16.msra.mxu0 %v414
    %424 = vmatprep.subr.bf16.mxu0 0
    %425 = vmatpush1.bf16.msra.mxu0 0
    %426 = vmatprep.subr.bf16.mxu0 0
    %427 = vmatpush1.bf16.msra.mxu0 0
    %428 = vmatprep.subr.bf16.mxu0 0
    %429 = vmatpush1.bf16.msra.mxu0 0
    %430 = vmatprep.subr.bf16.mxu0 0
    %431 = vmatpush1.bf16.msra.mxu0 0
    %432 = vmatprep.subr.bf16.mxu0 0
    %433 = vmatpush1.bf16.msra.mxu0 0
    %434 = vmatprep.subr.bf16.mxu0 0
    %435 = vmatpush1.bf16.msra.mxu0 0
    %436 = vmatprep.subr.bf16.mxu0 0
    %437 = vmatpush1.bf16.msra.mxu0 0
    %438 = vmatprep.subr.bf16.mxu0 0
    %439 = vmatpush1.bf16.msra.mxu0 0
    %440 = vmatprep.subr.bf16.mxu0 0
    %441 = vmatpush1.bf16.msra.mxu0 0
    %442 = vmatprep.subr.bf16.mxu0 0
    %443 = vmatpush1.bf16.msra.mxu0 0
    %444 = vmatprep.subr.bf16.mxu0 0
    %445 = vmatpush1.bf16.msra.mxu0 0
    %446 = vmatprep.subr.bf16.mxu0 0
    %447 = vmatpush1.bf16.msra.mxu0 0
    %448 = vmatprep.subr.bf16.mxu0 0
    %449 = vmatpush1.bf16.msra.mxu0 0
    %450 = vmatprep.subr.bf16.mxu0 0
    %451 = vmatpush1.bf16.msra.mxu0 0
    %452 = vmatprep.subr.bf16.mxu0 0
    %453 = vmatpush1.bf16.msra.mxu0 0
    %454 = vmatprep.mubr.bf16.mxu0 0
    %455 = vmatmul.mubr.bf16.gmra.mrb[0].mxu0 %v417
    %v456 = vpop.f32.mrb[0].mxu0
    %v457 = vadd.f32 0.0, %v456
    %v458 = vpop.f32.mrb[0].mxu0
    %v459 = vpop.f32.mrb[0].mxu0
    %v460 = vadd.f32 0.0, %v459
    %v461 = vpop.f32.mrb[0].mxu0
    %462 = vmatprep.mubr.bf16.mxu0 0
    %463 = vmatmul.mubr.bf16.gmra.mrb[0].mxu0 %v420
    %v464 = vpop.f32.mrb[0].mxu0
    %v465 = vadd.f32 0.0, %v464
    %v466 = vpop.f32.mrb[0].mxu0
    %v467 = vpop.f32.mrb[0].mxu0
    %v468 = vadd.f32 0.0, %v467
    %v469 = vpop.f32.mrb[0].mxu0
    %470 = vdwg.mxu0
    %v471 = vpack.c.bf16 %v460, %v457
    %v472 = vpack.c.bf16 %v468, %v465
    %473 = vmatprep.subr.bf16.mxu0 0
    %474 = vmatpush1.bf16.msra.mxu0 %v471
    %475 = vmatprep.subr.bf16.mxu0 0
    %476 = vmatpush1.bf16.msra.mxu0 %v472
    %477 = vmatprep.subr.bf16.mxu0 0
    %478 = vmatpush1.bf16.msra.mxu0 0
    %479 = vmatprep.subr.bf16.mxu0 0
    %480 = vmatpush1.bf16.msra.mxu0 0
    %481 = vmatprep.subr.bf16.mxu0 0
    %482 = vmatpush1.bf16.msra.mxu0 0
    %483 = vmatprep.subr.bf16.mxu0 0
    %484 = vmatpush1.bf16.msra.mxu0 0
    %485 = vmatprep.subr.bf16.mxu0 0
    %486 = vmatpush1.bf16.msra.mxu0 0
    %487 = vmatprep.subr.bf16.mxu0 0
    %488 = vmatpush1.bf16.msra.mxu0 0
    %489 = vmatprep.subr.bf16.mxu0 0
    %490 = vmatpush1.bf16.msra.mxu0 0
    %491 = vmatprep.subr.bf16.mxu0 0
    %492 = vmatpush1.bf16.msra.mxu0 0
    %493 = vmatprep.subr.bf16.mxu0 0
    %494 = vmatpush1.bf16.msra.mxu0 0
    %495 = vmatprep.subr.bf16.mxu0 0
    %496 = vmatpush1.bf16.msra.mxu0 0
    %497 = vmatprep.subr.bf16.mxu0 0
    %498 = vmatpush1.bf16.msra.mxu0 0
    %499 = vmatprep.subr.bf16.mxu0 0
    %500 = vmatpush1.bf16.msra.mxu0 0
    %501 = vmatprep.subr.bf16.mxu0 0
    %502 = vmatpush1.bf16.msra.mxu0 0
    %503 = vmatprep.subr.bf16.mxu0 0
    %504 = vmatpush1.bf16.msra.mxu0 0
    %505 = vmatprep.mubr.bf16.mxu0 0
    %506 = vmatmul.mubr.bf16.gmra.mrb[0].mxu0 %v123
    %v507 = vpop.f32.mrb[0].mxu0
    %v508 = vadd.f32 0.0, %v507
    %v509 = vpop.f32.mrb[0].mxu0
    %v510 = vpop.f32.mrb[0].mxu0
    %v511 = vadd.f32 0.0, %v510
    %v512 = vpop.f32.mrb[0].mxu0
    %513 = vmatprep.mubr.bf16.mxu0 0
    %514 = vmatmul.mubr.bf16.gmra.mrb[0].mxu0 %v126
    %v515 = vpop.f32.mrb[0].mxu0
    %v516 = vadd.f32 0.0, %v515
    %v517 = vpop.f32.mrb[0].mxu0
    %v518 = vpop.f32.mrb[0].mxu0
    %v519 = vadd.f32 0.0, %v518
    %v520 = vpop.f32.mrb[0].mxu0
    %521 = vdwg.mxu0
    %v522 = vsel %vm53, %v508, 0.0
    %v523 = vsel %vm53, %v511, 0.0
    %v524 = vadd.f32 %v522, %v523
    %v525 = vsel %vm53, %v516, 0.0
    %v526 = vadd.f32 %v524, %v525
    %v527 = vsel %vm53, %v519, 0.0
    %v528 = vadd.f32 %v526, %v527
    %v529 = vrot.slane %v528, 4
    %v530 = vadd.f32 %v528, %v529
    %v531 = vrot.slane %v530, 2
    %v532 = vadd.f32 %v530, %v531
    %v533 = vrot.slane %v532, 1
    %v534 = vadd.f32 %v532, %v533
    %v535 = vmul.f32 %v534, %v190
    %v536 = vsub.f32 %v508, %v535
    %v537 = vsub.f32 %v511, %v535
    %v538 = vsub.f32 %v516, %v535
    %v539 = vsub.f32 %v519, %v535
    %v540 = vmul.f32 %v536, %v536
    %v541 = vmul.f32 %v537, %v537
    %v542 = vmul.f32 %v538, %v538
    %v543 = vmul.f32 %v539, %v539
    %v544 = vsel %vm53, %v540, 0.0
    %v545 = vsel %vm53, %v541, 0.0
    %v546 = vadd.f32 %v544, %v545
    %v547 = vsel %vm53, %v542, 0.0
    %v548 = vadd.f32 %v546, %v547
    %v549 = vsel %vm53, %v543, 0.0
    %v550 = vadd.f32 %v548, %v549
    %v551 = vrot.slane %v550, 4
    %v552 = vadd.f32 %v550, %v551
    %v553 = vrot.slane %v552, 2
    %v554 = vadd.f32 %v552, %v553
    %v555 = vrot.slane %v554, 1
    %v556 = vadd.f32 %v554, %v555
    %v557 = vmul.f32 %v556, %v190
    %v558 = vadd.f32 %v557, 1e-05
    %v559 = vrsqrt.pop %v558
    %v560 = vmul.f32 %v536, %v559
    %v561 = vmul.f32 %v537, %v559
    %v562 = vmul.f32 %v538, %v559
    %v563 = vmul.f32 %v539, %v559
    %v564 = vlaneseq
    %v565 = vshrl.u32 %v564, 7
    %v566 = vsub.s32 4, %v565
    %v567 = vrot.slane %v36, %v566
    %v568 = vmul.f32 %v560, %v567
    %v569 = vmul.f32 %v561, %v567
    %v570 = vmul.f32 %v562, %v567
    %v571 = vmul.f32 %v563, %v567
    %v572 = vlaneseq
    %v573 = vshrl.u32 %v572, 7
    %v574 = vsub.s32 5, %v573
    %v575 = vrot.slane %v36, %v574
    %v576 = vadd.f32 %v568, %v575
    %v577 = vadd.f32 %v569, %v575
    %v578 = vadd.f32 %v570, %v575
    %v579 = vadd.f32 %v571, %v575
    %v580 = vld [vmem:[%s4] sm:$0x1]
    %v582 = vsel %vm121, %v580, 0
    %584 = vmatprep.subr.bf16.mxu0 0
    %585 = vmatpush1.bf16.msra.mxu0 %v236
    %586 = vmatprep.subr.bf16.mxu0 0
    %587 = vmatpush1.bf16.msra.mxu0 %v237
    %588 = vmatprep.subr.bf16.mxu0 0
    %589 = vmatpush1.bf16.msra.mxu0 0
    %590 = vmatprep.subr.bf16.mxu0 0
    %591 = vmatpush1.bf16.msra.mxu0 0
    %592 = vmatprep.subr.bf16.mxu0 0
    %593 = vmatpush1.bf16.msra.mxu0 0
    %594 = vmatprep.subr.bf16.mxu0 0
    %595 = vmatpush1.bf16.msra.mxu0 0
    %596 = vmatprep.subr.bf16.mxu0 0
    %597 = vmatpush1.bf16.msra.mxu0 0
    %598 = vmatprep.subr.bf16.mxu0 0
    %599 = vmatpush1.bf16.msra.mxu0 0
    %600 = vmatprep.subr.bf16.mxu0 0
    %601 = vmatpush1.bf16.msra.mxu0 0
    %602 = vmatprep.subr.bf16.mxu0 0
    %603 = vmatpush1.bf16.msra.mxu0 0
    %604 = vmatprep.subr.bf16.mxu0 0
    %605 = vmatpush1.bf16.msra.mxu0 0
    %606 = vmatprep.subr.bf16.mxu0 0
    %607 = vmatpush1.bf16.msra.mxu0 0
    %608 = vmatprep.subr.bf16.mxu0 0
    %609 = vmatpush1.bf16.msra.mxu0 0
    %610 = vmatprep.subr.bf16.mxu0 0
    %611 = vmatpush1.bf16.msra.mxu0 0
    %612 = vmatprep.subr.bf16.mxu0 0
    %613 = vmatpush1.bf16.msra.mxu0 0
    %614 = vmatprep.subr.bf16.mxu0 0
    %615 = vmatpush1.bf16.msra.mxu0 0
    %616 = vmatprep.mubr.bf16.mxu0 0
    %617 = vmatmul.mubr.bf16.gmra.mrb[0].mxu0 %v582
    %v618 = vpop.f32.mrb[0].mxu0
    %v619 = vadd.f32 0.0, %v618
    %v620 = vpop.f32.mrb[0].mxu0
    %v621 = vpop.f32.mrb[0].mxu0
    %v622 = vpop.f32.mrb[0].mxu0
    %623 = vdwg.mxu0
    %624 = vmatprep.subr.bf16.mxu0 0
    %625 = vmatpush1.bf16.msra.mxu0 %v408
    %626 = vmatprep.subr.bf16.mxu0 0
    %627 = vmatpush1.bf16.msra.mxu0 %v409
    %628 = vmatprep.subr.bf16.mxu0 0
    %629 = vmatpush1.bf16.msra.mxu0 0
    %630 = vmatprep.subr.bf16.mxu0 0
    %631 = vmatpush1.bf16.msra.mxu0 0
    %632 = vmatprep.subr.bf16.mxu0 0
    %633 = vmatpush1.bf16.msra.mxu0 0
    %634 = vmatprep.subr.bf16.mxu0 0
    %635 = vmatpush1.bf16.msra.mxu0 0
    %636 = vmatprep.subr.bf16.mxu0 0
    %637 = vmatpush1.bf16.msra.mxu0 0
    %638 = vmatprep.subr.bf16.mxu0 0
    %639 = vmatpush1.bf16.msra.mxu0 0
    %640 = vmatprep.subr.bf16.mxu0 0
    %641 = vmatpush1.bf16.msra.mxu0 0
    %642 = vmatprep.subr.bf16.mxu0 0
    %643 = vmatpush1.bf16.msra.mxu0 0
    %644 = vmatprep.subr.bf16.mxu0 0
    %645 = vmatpush1.bf16.msra.mxu0 0
    %646 = vmatprep.subr.bf16.mxu0 0
    %647 = vmatpush1.bf16.msra.mxu0 0
    %648 = vmatprep.subr.bf16.mxu0 0
    %649 = vmatpush1.bf16.msra.mxu0 0
    %650 = vmatprep.subr.bf16.mxu0 0
    %651 = vmatpush1.bf16.msra.mxu0 0
    %652 = vmatprep.subr.bf16.mxu0 0
    %653 = vmatpush1.bf16.msra.mxu0 0
    %654 = vmatprep.subr.bf16.mxu0 0
    %655 = vmatpush1.bf16.msra.mxu0 0
    %656 = vmatprep.mubr.bf16.mxu0 0
    %657 = vmatmul.mubr.bf16.gmra.mrb[0].mxu0 %v582
    %v658 = vpop.f32.mrb[0].mxu0
    %v659 = vadd.f32 0.0, %v658
    %v660 = vpop.f32.mrb[0].mxu0
    %v661 = vpop.f32.mrb[0].mxu0
    %v662 = vpop.f32.mrb[0].mxu0
    %663 = vdwg.mxu0
    %v664 = vpack.c.bf16 %v577, %v576
    %v665 = vpack.c.bf16 %v579, %v578
    %666 = vmatprep.subr.bf16.mxu0 0
    %667 = vmatpush1.bf16.msra.mxu0 %v664
    %668 = vmatprep.subr.bf16.mxu0 0
    %669 = vmatpush1.bf16.msra.mxu0 %v665
    %670 = vmatprep.subr.bf16.mxu0 0
    %671 = vmatpush1.bf16.msra.mxu0 0
    %672 = vmatprep.subr.bf16.mxu0 0
    %673 = vmatpush1.bf16.msra.mxu0 0
    %674 = vmatprep.subr.bf16.mxu0 0
    %675 = vmatpush1.bf16.msra.mxu0 0
    %676 = vmatprep.subr.bf16.mxu0 0
    %677 = vmatpush1.bf16.msra.mxu0 0
    %678 = vmatprep.subr.bf16.mxu0 0
    %679 = vmatpush1.bf16.msra.mxu0 0
    %680 = vmatprep.subr.bf16.mxu0 0
    %681 = vmatpush1.bf16.msra.mxu0 0
    %682 = vmatprep.subr.bf16.mxu0 0
    %683 = vmatpush1.bf16.msra.mxu0 0
    %684 = vmatprep.subr.bf16.mxu0 0
    %685 = vmatpush1.bf16.msra.mxu0 0
    %686 = vmatprep.subr.bf16.mxu0 0
    %687 = vmatpush1.bf16.msra.mxu0 0
    %688 = vmatprep.subr.bf16.mxu0 0
    %689 = vmatpush1.bf16.msra.mxu0 0
    %690 = vmatprep.subr.bf16.mxu0 0
    %691 = vmatpush1.bf16.msra.mxu0 0
    %692 = vmatprep.subr.bf16.mxu0 0
    %693 = vmatpush1.bf16.msra.mxu0 0
    %694 = vmatprep.subr.bf16.mxu0 0
    %695 = vmatpush1.bf16.msra.mxu0 0
    %696 = vmatprep.subr.bf16.mxu0 0
    %697 = vmatpush1.bf16.msra.mxu0 0
    %698 = vmatprep.mubr.bf16.mxu0 0
    %699 = vmatmul.mubr.bf16.gmra.mrb[0].mxu0 %v582
    %v700 = vpop.f32.mrb[0].mxu0
    %v701 = vadd.f32 0.0, %v700
    %v702 = vpop.f32.mrb[0].mxu0
    %v703 = vpop.f32.mrb[0].mxu0
    %v704 = vpop.f32.mrb[0].mxu0
    %705 = vdwg.mxu0
    %707 = vrot.lane.b32.xlu0 %v659, 16
    %v708 = vpop.permute.xlu0 %707
    %711 = vrot.lane.b32.xlu0 %v701, 32
    %v712 = vpop.permute.xlu0 %711
    %v714 = vsel %vm53, %v619, %v708
    %v715 = vsel %vm121, %v714, %v712
    %vm716 = vcmask 386048
    %717 = vst.msk [vmem:[#allocation2] sm:$0x3] %vm716, %v715
    // Predicated region
    $region22: #{gnn_layer_forward.1} parent=1 // pred_check
      _
    $region23: #{gnn_layer_forward.1} parent=1 // pred_check_branch
      %719 = sbr.rel (0) target = $region25
    $region24: #{gnn_layer_forward.1} parent=1 // pred_region
      %s721 = ssub.s32 32, 32
      %722 = vsyncadd [#allocation3], %s721
      %s724 = sshll.u32 [#allocation2], 4
      %s725 = int_to_ptr.vmem [resolvable:$true] %s724
      %727 = dma.vmem_to_hbm [thread:$0]  %s725, 32, %s5, [#allocation3]
    $region25: #{gnn_layer_forward.1} parent=1 // pred_fallthru
      _
    // Predicated region
    $region26: #{gnn_layer_forward.1} parent=1 // pred_check
      _
    $region27: #{gnn_layer_forward.1} parent=1 // pred_check_branch
      %729 = sbr.rel (0) target = $region29
    $region28: #{gnn_layer_forward.1} parent=1 // pred_region
      %730 = dma.done [#allocation3], 32
    $region29: #{gnn_layer_forward.1} parent=1 // pred_fallthru
      _
    %731 = vsyncpa [#allocation3], 1

</llo_original>
